<compile_context>
chip_gen: v7x
topology: tpu7x:2x2x1
jax: 0.10.0
libtpu: 0.0.40
codegen_flags: <defaults>
</compile_context>

<pallas_src>
import functools

import jax
import jax.numpy as jnp
from jax.experimental import pallas as pl
from jax.experimental.pallas import tpu as pltpu


def _round_up(x, m):
    return ((x + m - 1) // m) * m


_FALLBACK_VMEM = 64 * 1024 * 1024      # conservative: v7x per-TensorCore VMEM
_MAX_VMEM = 128 * 1024 * 1024          # v5e / v6e physical VMEM
_VMEM_HEADROOM = 16 * 1024 * 1024


@functools.lru_cache(maxsize=1)
def _usable_vmem_bytes():
    """Per-TensorCore physical VMEM minus headroom (generation-aware)."""
    phys = _FALLBACK_VMEM
    try:
        info = pltpu.get_tpu_info()
        for attr in ("vmem_capacity_bytes", "vmem_size_bytes", "vmem_bytes"):
            val = getattr(info, attr, None)
            if val:
                phys = int(val)
                break
    except Exception:                   # no TPU query available -> conservative
        pass
    phys = min(phys, _MAX_VMEM)
    return max(phys - _VMEM_HEADROOM, 16 * 1024 * 1024)


# --------------------------------------------------------------------------- #
# Kernel 1: fused path (whole problem VMEM-resident, layers unrolled in-kernel)
# --------------------------------------------------------------------------- #
def _lightgcn_fused_kernel(a_ref, e0_ref, out_ref, *, n_layers, inv_n_layers):
    """a_ref [Np,Np] (f32/bf16), e0_ref [Np,Dp] f32, out_ref [Np,Dp] f32."""
    cast_rhs = a_ref.dtype != jnp.float32       # bf16 adjacency -> bf16 MXU inputs
    cur = e0_ref[...].astype(jnp.float32)
    acc = None
    for _ in range(n_layers):                   # static unroll: no grid-step overhead
        rhs = cur.astype(a_ref.dtype) if cast_rhs else cur   # only [Np,Dp], cheap
        cur = jnp.dot(a_ref[...], rhs, preferred_element_type=jnp.float32)
        acc = cur if acc is None else acc + cur
    out_ref[...] = (acc * inv_n_layers).astype(out_ref.dtype)


# --------------------------------------------------------------------------- #
# Kernel 2: large-N streaming path (A row tiles streamed, embeddings resident)
# --------------------------------------------------------------------------- #
def _lightgcn_tiled_kernel(a_ref, e0_hbm_ref, out_ref, buf_ref, acc_ref, sem,
                           *, tm, inv_n_layers):
    """Grid = (n_layers, Np // tm); layer axis outermost and sequential.

    a_ref      : [tm, Np]    row tile of A for this (layer, i) step (streamed)
    e0_hbm_ref : [Np, Dp]    initial embeddings, left in HBM (pl.ANY), buf dtype
    out_ref    : [tm, Dp]    output row tile (mean over layers), f32
    buf_ref    : [2, Np, Dp] ping-pong layer embeddings (VMEM scratch, A's
                             compute dtype -- no per-step full-matrix cast)
    acc_ref    : [Np, Dp]    running f32 sum over layers (VMEM scratch)
    sem        : (1,) DMA semaphore for the one-shot e0 copy
    """
    l = pl.program_id(0)                        # layer (must stay sequential)
    i = pl.program_id(1)                        # row tile within the layer
    row0 = pl.multiple_of(i * tm, tm)
    rows = pl.ds(row0, tm)

    @pl.when(jnp.logical_and(l == 0, i == 0))
    def _():
        # One-shot init: start the e0 DMA, hide it behind zeroing the f32
        # accumulator, then wait.
        cp = pltpu.make_async_copy(e0_hbm_ref, buf_ref.at[0], sem.at[0])
        cp.start()
        acc_ref[...] = jnp.zeros_like(acc_ref)
        cp.wait()

    src = l % 2                                 # layer l reads slot l % 2
    cur = buf_ref[src]                          # [Np, Dp], VMEM resident, no cast
    new_rows = jnp.dot(a_ref[...], cur, preferred_element_type=jnp.float32)

    # Write this row tile of layer l's output into the *other* ping-pong slot
    # (cast only the (tm, Dp) tile, not the full matrix).
    @pl.when(src == 0)
    def _():
        buf_ref[1, rows, :] = new_rows.astype(buf_ref.dtype)

    @pl.when(src == 1)
    def _():
        buf_ref[0, rows, :] = new_rows.astype(buf_ref.dtype)

    acc_new = acc_ref[rows, :] + new_rows       # f32 accumulation of the mean
    acc_ref[rows, :] = acc_new
    # Unconditional write: intermediate layers write partial means that the last
    # layer overwrites (avoids DMA-ing uninitialized VMEM out buffers to HBM).
    out_ref[...] = (acc_new * inv_n_layers).astype(out_ref.dtype)
    # TODO(synk): mid-size "resident-A" variant -- DMA A tiles into a VMEM
    # scratch during layer 0 (overlapped with the layer-0 matmuls) and reuse
    # them for layers 1..L-1, cutting A HBM traffic another n_layers x.
    # TODO(synk): for very large Np also tile the contraction (K) axis so the
    # streamed A tile is (tm, tk) instead of (tm, Np).
    # TODO(synk): v7x megacore split (row-parallel across the 2 TensorCores with
    # buf/acc in VMEM_SHARED/CMEM + pltpu.core_barrier between layers).


def _pick_row_tile(n, dp, a_itemsize, buf_itemsize, vmem_budget, row_tile=None):
    """Largest row tile whose streaming-path VMEM footprint fits the budget."""
    cands = [512, 256, 128, 64, 32, 16, 8]
    if row_tile is not None:
        rt = max(8, _round_up(int(row_tile), 8))
        cands = [rt] + [c for c in cands if c < rt]
    n8 = _round_up(n, 8)
    for tm in cands:
        tm = min(tm, n8)
        np_pad = _round_up(n, tm)
        footprint = (2 * np_pad * dp * buf_itemsize    # ping-pong embeddings
                     + np_pad * dp * 4                 # f32 layer-sum accumulator
                     + 2 * tm * np_pad * a_itemsize    # A row-tile double buffer
                     + 2 * tm * dp * 4)                # out-tile double buffer
        if footprint <= vmem_budget:
            return tm, np_pad
    tm = min(8, n8)                                    # degrade gracefully
    return tm, _round_up(n, tm)


# --------------------------------------------------------------------------- #
# Wrapper
# --------------------------------------------------------------------------- #
@functools.partial(
    jax.jit,
    static_argnames=("n_layers", "adj_dtype", "row_tile", "force_path"))
def lightgcn_forward(norm_adj, user_emb, item_emb, n_layers=3, *,
                     adj_dtype=None, row_tile=None, force_path=None):
    """Returns (user_all_embeddings, item_all_embeddings)."""
    assert n_layers >= 1
    assert force_path in (None, "fused", "streaming")
    num_users = user_emb.shape[0]
    out_dtype = user_emb.dtype

    ego = jnp.concatenate([user_emb, item_emb], axis=0).astype(jnp.float32)
    N, D = ego.shape
    # Lane-dense padding: embedding dim -> multiple of 128 (zero cols are exact:
    # A @ [E | 0] = [A @ E | 0]).
    Dp = _round_up(D, 128)

    vmem_budget = _usable_vmem_bytes()

    def _fused_fits(itemsize):
        np8 = _round_up(N, 8)
        # whole A (single-buffered) + e0 + out + unrolled per-layer temps.
        return np8 * np8 * itemsize + 8 * np8 * Dp * 4 <= vmem_budget

    # ---- path / adjacency-dtype policy ------------------------------------ #
    if adj_dtype is not None:
        a_dtype = jnp.dtype(adj_dtype)
        fused = (_fused_fits(a_dtype.itemsize) if force_path is None
                 else force_path == "fused")
    elif force_path == "fused":
        a_dtype, fused = jnp.dtype(jnp.float32), True
    elif force_path == "streaming":
        a_dtype, fused = jnp.dtype(jnp.bfloat16), False
    elif _fused_fits(4):
        a_dtype, fused = jnp.dtype(jnp.float32), True    # A read once: keep f32
    elif _fused_fits(2):
        a_dtype, fused = jnp.dtype(jnp.bfloat16), True   # bf16 lets A stay resident
    else:
        a_dtype, fused = jnp.dtype(jnp.bfloat16), False  # HBM-bound on A -> bf16
    # TODO(synk): evaluate fp8 (e4m3) adjacency for the streaming path on v7x.

    adj = norm_adj.astype(a_dtype)

    if fused:
        # ---------- fused path: A read once, layers unrolled in one call ---- #
        Np = _round_up(N, 8)
        # Zero-padding nodes is exact: zero rows/cols of A and zero rows of e0
        # do not perturb the real rows (padded outputs sliced off below).
        a_p = jnp.pad(adj, ((0, Np - N), (0, Np - N)))
        e0_p = jnp.pad(ego, ((0, Np - N), (0, Dp - D)))
        flops = int(2 * n_layers * Np * Np * Dp)
        cost = pl.CostEstimate(
            flops=flops, transcendentals=0,
            bytes_accessed=int(Np * Np * a_dtype.itemsize + 2 * Np * Dp * 4))
        final = pl.pallas_call(
            functools.partial(_lightgcn_fused_kernel,
                              n_layers=n_layers, inv_n_layers=1.0 / n_layers),
            out_shape=jax.ShapeDtypeStruct((Np, Dp), jnp.float32),
            # Whole arrays resident in VMEM, single-buffered (there is no grid,
            # so pipelined double-buffering would only waste VMEM).
            in_specs=[pl.BlockSpec(memory_space=pltpu.MemorySpace.VMEM),
                      pl.BlockSpec(memory_space=pltpu.MemorySpace.VMEM)],
            out_specs=pl.BlockSpec(memory_space=pltpu.MemorySpace.VMEM),
            compiler_params=pltpu.CompilerParams(
                vmem_limit_bytes=int(vmem_budget)),
            cost_estimate=cost,
        )(a_p, e0_p)
    else:
        # ---------- streaming path: A row tiles streamed over (layer, tile) - #
        buf_dtype = (jnp.dtype(jnp.float32) if a_dtype == jnp.dtype(jnp.float32)
                     else jnp.dtype(jnp.bfloat16))
        tm, Np = _pick_row_tile(N, Dp, a_dtype.itemsize, buf_dtype.itemsize,
                                vmem_budget, row_tile)
        a_p = jnp.pad(adj, ((0, Np - N), (0, Np - N)))
        # Pre-cast e0 to the resident-embedding dtype so the one-shot DMA lands
        # directly in it (no in-kernel full-matrix cast).
        e0_p = jnp.pad(ego, ((0, Np - N), (0, Dp - D))).astype(buf_dtype)
        flops = int(2 * n_layers * Np * Np * Dp)
        cost = pl.CostEstimate(
            flops=flops, transcendentals=0,
            bytes_accessed=int(n_layers * Np * Np * a_dtype.itemsize
                               + Np * Dp * (buf_dtype.itemsize + 4)))
        final = pl.pallas_call(
            functools.partial(_lightgcn_tiled_kernel,
                              tm=tm, inv_n_layers=1.0 / n_layers),
            out_shape=jax.ShapeDtypeStruct((Np, Dp), jnp.float32),
            grid_spec=pltpu.PrefetchScalarGridSpec(
                num_scalar_prefetch=0,
                grid=(n_layers, Np // tm),
                in_specs=[
                    # A row tiles, streamed / double-buffered by BlockSpec.
                    pl.BlockSpec((tm, Np), lambda l, i: (i, 0)),
                    # e0 stays in HBM; copied once inside the kernel.
                    pl.BlockSpec(memory_space=pl.ANY),
                ],
                out_specs=pl.BlockSpec((tm, Dp), lambda l, i: (i, 0)),
                scratch_shapes=[
                    pltpu.VMEM((2, Np, Dp), buf_dtype),   # ping-pong embeddings
                    pltpu.VMEM((Np, Dp), jnp.float32),    # layer-sum accumulator
                    pltpu.SemaphoreType.DMA((1,)),        # one-shot e0 DMA
                ],
            ),
            compiler_params=pltpu.CompilerParams(
                # Layers depend on all rows of the previous layer through the
                # shared ping-pong scratch -> both axes must stay sequential.
                dimension_semantics=("arbitrary", "arbitrary"),
                vmem_limit_bytes=int(vmem_budget),
            ),
            cost_estimate=cost,
        )(a_p, e0_p)

    final = final[:N, :D].astype(out_dtype)
    return final[:num_users], final[num_users:]


# --------------------------------------------------------------------------- #
# Reference + synthetic data
# --------------------------------------------------------------------------- #
def _build_norm_adj(key, num_users, num_items):
    """Deterministic synthetic symmetric-normalized bipartite adjacency (dense)."""
    N = num_users + num_items
    r = (jax.random.uniform(key, (num_users, num_items)) < 0.1).astype(jnp.float32)
    adj = jnp.zeros((N, N), jnp.float32)
    adj = adj.at[:num_users, num_users:].set(r)
    adj = adj.at[num_users:, :num_users].set(r.T)
    deg = adj.sum(axis=1)
    d_inv_sqrt = jnp.where(deg > 0, 1.0 / jnp.sqrt(jnp.maximum(deg, 1e-12)), 0.0)
    return adj * d_inv_sqrt[:, None] * d_inv_sqrt[None, :]


def _reference_forward(norm_adj, user_emb, item_emb, n_layers=3):
    ego = jnp.concatenate([user_emb, item_emb], axis=0)
    outs = []
    for _ in range(n_layers):
        ego = norm_adj @ ego
        outs.append(ego)
    final = jnp.mean(jnp.stack(outs, axis=1), axis=1)
    return final[: user_emb.shape[0]], final[user_emb.shape[0]:]


if __name__ == "__main__":
    key = jax.random.PRNGKey(0)
    k_adj, k_u, k_i = jax.random.split(key, 3)

    # ---- Test 1: module-default toy shape -> fused f32 path ---------------- #
    num_users, num_items, embedding_size, n_layers = 48, 80, 64, 3
    # reset_parameters(init_method='uniform') -> deterministic uniform init here.
    user_emb = jax.random.uniform(k_u, (num_users, embedding_size),
                                  dtype=jnp.float32, minval=-0.05, maxval=0.05)
    item_emb = jax.random.uniform(k_i, (num_items, embedding_size),
                                  dtype=jnp.float32, minval=-0.05, maxval=0.05)
    norm_adj = _build_norm_adj(k_adj, num_users, num_items)

    # TODO(synk): perturbed=True branch (rand_like noise + F.normalize + dropout)
    # is a training-time stochastic path and is not implemented in the kernel.
    # TODO(synk): production norm_adj is sparse (torch.sparse.mm); a CSR-style
    # scalar-prefetch gather kernel should replace the dense [N,N] stand-in at scale.

    u_out, i_out = lightgcn_forward(norm_adj, user_emb, item_emb, n_layers=n_layers)
    jax.block_until_ready((u_out, i_out))
    u_ref, i_ref = _reference_forward(norm_adj, user_emb, item_emb, n_layers)
    assert u_out.shape == (num_users, embedding_size)
    assert i_out.shape == (num_items, embedding_size)
    assert jnp.allclose(u_out, u_ref, atol=1e-5, rtol=1e-5)
    assert jnp.allclose(i_out, i_ref, atol=1e-5, rtol=1e-5)

    # ---- Test 2a: streaming path forced, explicit f32 adjacency ------------- #
    nu2, ni2 = 200, 300
    k2a, k2u, k2i = jax.random.split(jax.random.PRNGKey(1), 3)
    ue2 = jax.random.uniform(k2u, (nu2, embedding_size),
                             dtype=jnp.float32, minval=-0.05, maxval=0.05)
    ie2 = jax.random.uniform(k2i, (ni2, embedding_size),
                             dtype=jnp.float32, minval=-0.05, maxval=0.05)
    adj2 = _build_norm_adj(k2a, nu2, ni2)
    u2r, i2r = _reference_forward(adj2, ue2, ie2, n_layers)

    u2, i2 = lightgcn_forward(adj2, ue2, ie2, n_layers=n_layers,
                              adj_dtype=jnp.float32, force_path="streaming")
    jax.block_until_ready((u2, i2))
    assert u2.shape == (nu2, embedding_size) and i2.shape == (ni2, embedding_size)
    assert jnp.allclose(u2, u2r, atol=3e-5, rtol=1e-4)
    assert jnp.allclose(i2, i2r, atol=3e-5, rtol=1e-4)

    # ---- Test 2b: streaming path default policy (bf16 A + bf16 resident) ---- #
    u2b, i2b = lightgcn_forward(adj2, ue2, ie2, n_layers=n_layers,
                                force_path="streaming")
    jax.block_until_ready((u2b, i2b))
    assert jnp.allclose(u2b, u2r, atol=3e-3, rtol=5e-2)
    assert jnp.allclose(i2b, i2r, atol=3e-3, rtol=5e-2)

    # ---- Test 3: fused path with bf16 adjacency, loose tolerance ------------ #
    u3, i3 = lightgcn_forward(norm_adj, user_emb, item_emb, n_layers=n_layers,
                              adj_dtype=jnp.bfloat16)
    jax.block_until_ready((u3, i3))
    assert jnp.allclose(u3, u_ref, atol=2e-3, rtol=5e-2)
    assert jnp.allclose(i3, i_ref, atol=2e-3, rtol=5e-2)

    print("KERNEL_OK")
</pallas_src>

<mosaic_0001>
module attributes {stable_mosaic.version = 11 : i64} {
  func.func @_lightgcn_fused_kernel(%arg0: memref<128x128xf32, #tpu.memory_space<vmem>>, %arg1: memref<128x128xf32, #tpu.memory_space<vmem>>, %arg2: memref<128x128xf32, #tpu.memory_space<vmem>>) attributes {dimension_semantics = [], scalar_prefetch = 0 : i64, scratch_operands = 0 : i64, tpu.core_type = #tpu.core_type<tc>} {
    %c0 = arith.constant 0 : index
    %c0_0 = arith.constant 0 : index
    %0 = vector.load %arg1[%c0, %c0_0] : memref<128x128xf32, #tpu.memory_space<vmem>>, vector<128x128xf32>
    %c0_1 = arith.constant 0 : index
    %c0_2 = arith.constant 0 : index
    %1 = vector.load %arg0[%c0_1, %c0_2] : memref<128x128xf32, #tpu.memory_space<vmem>>, vector<128x128xf32>
    %cst = arith.constant dense<0.000000e+00> : vector<128x128xf32>
    %2 = tpu.matmul %1, %0, %cst {dimension_numbers = #tpu.dot_dimension_numbers<[1], [0], [0], [1], [0, 0, 1, 1], [], []>} : vector<128x128xf32>, vector<128x128xf32>, vector<128x128xf32> -> vector<128x128xf32>
    %c0_3 = arith.constant 0 : index
    %c0_4 = arith.constant 0 : index
    %3 = vector.load %arg0[%c0_3, %c0_4] : memref<128x128xf32, #tpu.memory_space<vmem>>, vector<128x128xf32>
    %cst_5 = arith.constant dense<0.000000e+00> : vector<128x128xf32>
    %4 = tpu.matmul %3, %2, %cst_5 {dimension_numbers = #tpu.dot_dimension_numbers<[1], [0], [0], [1], [0, 0, 1, 1], [], []>} : vector<128x128xf32>, vector<128x128xf32>, vector<128x128xf32> -> vector<128x128xf32>
    %5 = arith.addf %2, %4 : vector<128x128xf32>
    %c0_6 = arith.constant 0 : index
    %c0_7 = arith.constant 0 : index
    %6 = vector.load %arg0[%c0_6, %c0_7] : memref<128x128xf32, #tpu.memory_space<vmem>>, vector<128x128xf32>
    %cst_8 = arith.constant dense<0.000000e+00> : vector<128x128xf32>
    %7 = tpu.matmul %6, %4, %cst_8 {dimension_numbers = #tpu.dot_dimension_numbers<[1], [0], [0], [1], [0, 0, 1, 1], [], []>} : vector<128x128xf32>, vector<128x128xf32>, vector<128x128xf32> -> vector<128x128xf32>
    %8 = arith.addf %5, %7 : vector<128x128xf32>
    %cst_9 = arith.constant 0.333333343 : f32
    %9 = vector.broadcast %cst_9 : f32 to vector<128x128xf32>
    %10 = arith.mulf %8, %9 : vector<128x128xf32>
    %c0_10 = arith.constant 0 : index
    %c0_11 = arith.constant 0 : index
    %11 = vector.load %arg2[%c0_10, %c0_11] : memref<128x128xf32, #tpu.memory_space<vmem>>, vector<128x128xf32>
    tpu.vector_store %arg2[%c0_10, %c0_11], %10 {strides = array<i32>} : memref<128x128xf32, #tpu.memory_space<vmem>>, vector<128x128xf32>,
    return
  }
}

</mosaic_0001>

<llo_original>
// kernel: lightgcn_forward.1
$region0: #{lightgcn_forward.1}
  #allocation0 [shape = 'u32[]', space=smem, size = 0x4, offset = 0x4, fixed_abs, tag = 'smem constant byte address 0x4 - core index']
  #allocation1 [shape = 'u32[144,128]{1,0:T(1,128)}', space=vmem, size = 0x12000, scoped, tag = 'internal scratch']
  %s0 = inlined_call_operand.vmem [shape: f32[128,128], index: 0, kind: input, shape index: {}]
  %s1 = inlined_call_operand.vmem [shape: f32[128,128], index: 1, kind: input, shape index: {}]
  %s2 = inlined_call_operand.vmem [shape: f32[128,128], index: 2, kind: output, shape index: {}]
  %s3 = sld [smem:[#allocation0]]
  $region18: #{lightgcn_forward.1} parent=0
    _
  %s5 = ssub.s32 1, %s3
  %s6 = scalar_select 0, %s5, %s3
  // Predicated region
  $region2: #{lightgcn_forward.1} parent=0 // pred_check
    _
  $region3: #{lightgcn_forward.1} parent=0 // pred_check_branch
    %8 = sbr.rel (0) target = $region5
  $region4: #{lightgcn_forward.1} parent=0 // pred_region
    _
  $region5: #{lightgcn_forward.1} parent=0 // pred_fallthru
    _
  // Predicated region
  $region6: #{lightgcn_forward.1} parent=0 // pred_check
    _
  $region7: #{lightgcn_forward.1} parent=0 // pred_check_branch
    %10 = sbr.rel (0) target = $region9
  $region8: #{lightgcn_forward.1} parent=0 // pred_region
    _
  $region9: #{lightgcn_forward.1} parent=0 // pred_fallthru
    _
  %v11 = vld [vmem:[%s1] sm:$0xff]
  %v12 = vld [vmem:[%s1 + $0x8] sm:$0xff]
  %v13 = vld [vmem:[%s1 + $0x10] sm:$0xff]
  %v14 = vld [vmem:[%s1 + $0x18] sm:$0xff]
  %v15 = vld [vmem:[%s1 + $0x20] sm:$0xff]
  %v16 = vld [vmem:[%s1 + $0x28] sm:$0xff]
  %v17 = vld [vmem:[%s1 + $0x30] sm:$0xff]
  %v18 = vld [vmem:[%s1 + $0x38] sm:$0xff]
  %v19 = vld [vmem:[%s1 + $0x40] sm:$0xff]
  %v20 = vld [vmem:[%s1 + $0x48] sm:$0xff]
  %v21 = vld [vmem:[%s1 + $0x50] sm:$0xff]
  %v22 = vld [vmem:[%s1 + $0x58] sm:$0xff]
  %v23 = vld [vmem:[%s1 + $0x60] sm:$0xff]
  %v24 = vld [vmem:[%s1 + $0x68] sm:$0xff]
  %v25 = vld [vmem:[%s1 + $0x70] sm:$0xff]
  %v26 = vld [vmem:[%s1 + $0x78] sm:$0xff]
  %v27 = vld [vmem:[%s0] sm:$0xff]
  %v28 = vld [vmem:[%s0 + $0x8] sm:$0xff]
  %v29 = vld [vmem:[%s0 + $0x10] sm:$0xff]
  %v30 = vld [vmem:[%s0 + $0x18] sm:$0xff]
  %v31 = vld [vmem:[%s0 + $0x20] sm:$0xff]
  %v32 = vld [vmem:[%s0 + $0x28] sm:$0xff]
  %v33 = vld [vmem:[%s0 + $0x30] sm:$0xff]
  %v34 = vld [vmem:[%s0 + $0x38] sm:$0xff]
  %v35 = vld [vmem:[%s0 + $0x40] sm:$0xff]
  %v36 = vld [vmem:[%s0 + $0x48] sm:$0xff]
  %v37 = vld [vmem:[%s0 + $0x50] sm:$0xff]
  %v38 = vld [vmem:[%s0 + $0x58] sm:$0xff]
  %v39 = vld [vmem:[%s0 + $0x60] sm:$0xff]
  %v40 = vld [vmem:[%s0 + $0x68] sm:$0xff]
  %v41 = vld [vmem:[%s0 + $0x70] sm:$0xff]
  %v42 = vld [vmem:[%s0 + $0x78] sm:$0xff]
  %43 = vmatprep.subr.mxu0 0.0
  %44 = vmatpush1.msra.mxu0 %v11
  %45 = vmatprep.subr.mxu0 0.0
  %46 = vmatpush1.msra.mxu0 %v12
  %47 = vmatprep.subr.mxu0 0.0
  %48 = vmatpush1.msra.mxu0 %v13
  %49 = vmatprep.subr.mxu0 0.0
  %50 = vmatpush1.msra.mxu0 %v14
  %51 = vmatprep.subr.mxu0 0.0
  %52 = vmatpush1.msra.mxu0 %v15
  %53 = vmatprep.subr.mxu0 0.0
  %54 = vmatpush1.msra.mxu0 %v16
  %55 = vmatprep.subr.mxu0 0.0
  %56 = vmatpush1.msra.mxu0 %v17
  %57 = vmatprep.subr.mxu0 0.0
  %58 = vmatpush1.msra.mxu0 %v18
  %59 = vmatprep.subr.mxu0 0.0
  %60 = vmatpush1.msra.mxu0 %v19
  %61 = vmatprep.subr.mxu0 0.0
  %62 = vmatpush1.msra.mxu0 %v20
  %63 = vmatprep.subr.mxu0 0.0
  %64 = vmatpush1.msra.mxu0 %v21
  %65 = vmatprep.subr.mxu0 0.0
  %66 = vmatpush1.msra.mxu0 %v22
  %67 = vmatprep.subr.mxu0 0.0
  %68 = vmatpush1.msra.mxu0 %v23
  %69 = vmatprep.subr.mxu0 0.0
  %70 = vmatpush1.msra.mxu0 %v24
  %71 = vmatprep.subr.mxu0 0.0
  %72 = vmatpush1.msra.mxu0 %v25
  %73 = vmatprep.subr.mxu0 0.0
  %74 = vmatpush1.msra.mxu0 %v26
  %75 = vmatprep.subr.mxu0 0.0
  %76 = vmatpush1.msra.mxu0 0.0
  %77 = vmatprep.subr.mxu0 0.0
  %78 = vmatpush1.msra.mxu0 0.0
  %79 = vmatprep.subr.mxu0 0.0
  %80 = vmatpush1.msra.mxu0 0.0
  %81 = vmatprep.subr.mxu0 0.0
  %82 = vmatpush1.msra.mxu0 0.0
  %83 = vmatprep.subr.mxu0 0.0
  %84 = vmatpush1.msra.mxu0 0.0
  %85 = vmatprep.subr.mxu0 0.0
  %86 = vmatpush1.msra.mxu0 0.0
  %87 = vmatprep.subr.mxu0 0.0
  %88 = vmatpush1.msra.mxu0 0.0
  %89 = vmatprep.subr.mxu0 0.0
  %90 = vmatpush1.msra.mxu0 0.0
  %91 = vmatprep.subr.mxu0 0.0
  %92 = vmatpush1.msra.mxu0 0.0
  %93 = vmatprep.subr.mxu0 0.0
  %94 = vmatpush1.msra.mxu0 0.0
  %95 = vmatprep.subr.mxu0 0.0
  %96 = vmatpush1.msra.mxu0 0.0
  %97 = vmatprep.subr.mxu0 0.0
  %98 = vmatpush1.msra.mxu0 0.0
  %99 = vmatprep.subr.mxu0 0.0
  %100 = vmatpush1.msra.mxu0 0.0
  %101 = vmatprep.subr.mxu0 0.0
  %102 = vmatpush1.msra.mxu0 0.0
  %103 = vmatprep.subr.mxu0 0.0
  %104 = vmatpush1.msra.mxu0 0.0
  %105 = vmatprep.subr.mxu0 0.0
  %106 = vmatpush1.msra.mxu0 0.0
  %107 = vmatprep.mubr.f32.mxu0 0.0
  %108 = vmatmul.mubr.f32.gmra.mrb[0].mxu0 %v27
  %v109 = vpop.f32.mrb[0].mxu0
  %v110 = vadd.f32 0.0, %v109
  %v111 = vpop.f32.mrb[0].mxu0
  %112 = vmatprep.mubr.f32.mxu0 0.0
  %113 = vmatmul.mubr.f32.gmra.mrb[0].mxu0 %v28
  %v114 = vpop.f32.mrb[0].mxu0
  %v115 = vadd.f32 0.0, %v114
  %v116 = vpop.f32.mrb[0].mxu0
  %117 = vmatprep.mubr.f32.mxu0 0.0
  %118 = vmatmul.mubr.f32.gmra.mrb[0].mxu0 %v29
  %v119 = vpop.f32.mrb[0].mxu0
  %v120 = vadd.f32 0.0, %v119
  %v121 = vpop.f32.mrb[0].mxu0
  %122 = vmatprep.mubr.f32.mxu0 0.0
  %123 = vmatmul.mubr.f32.gmra.mrb[0].mxu0 %v30
  %v124 = vpop.f32.mrb[0].mxu0
  %v125 = vadd.f32 0.0, %v124
  %v126 = vpop.f32.mrb[0].mxu0
  %127 = vmatprep.mubr.f32.mxu0 0.0
  %128 = vmatmul.mubr.f32.gmra.mrb[0].mxu0 %v31
  %v129 = vpop.f32.mrb[0].mxu0
  %v130 = vadd.f32 0.0, %v129
  %v131 = vpop.f32.mrb[0].mxu0
  %132 = vmatprep.mubr.f32.mxu0 0.0
  %133 = vmatmul.mubr.f32.gmra.mrb[0].mxu0 %v32
  %v134 = vpop.f32.mrb[0].mxu0
  %v135 = vadd.f32 0.0, %v134
  %v136 = vpop.f32.mrb[0].mxu0
  %137 = vmatprep.mubr.f32.mxu0 0.0
  %138 = vmatmul.mubr.f32.gmra.mrb[0].mxu0 %v33
  %v139 = vpop.f32.mrb[0].mxu0
  %v140 = vadd.f32 0.0, %v139
  %v141 = vpop.f32.mrb[0].mxu0
  %142 = vmatprep.mubr.f32.mxu0 0.0
  %143 = vmatmul.mubr.f32.gmra.mrb[0].mxu0 %v34
  %v144 = vpop.f32.mrb[0].mxu0
  %v145 = vadd.f32 0.0, %v144
  %v146 = vpop.f32.mrb[0].mxu0
  %147 = vmatprep.mubr.f32.mxu0 0.0
  %148 = vmatmul.mubr.f32.gmra.mrb[0].mxu0 %v35
  %v149 = vpop.f32.mrb[0].mxu0
  %v150 = vadd.f32 0.0, %v149
  %v151 = vpop.f32.mrb[0].mxu0
  %152 = vmatprep.mubr.f32.mxu0 0.0
  %153 = vmatmul.mubr.f32.gmra.mrb[0].mxu0 %v36
  %v154 = vpop.f32.mrb[0].mxu0
  %v155 = vadd.f32 0.0, %v154
  %v156 = vpop.f32.mrb[0].mxu0
  %157 = vmatprep.mubr.f32.mxu0 0.0
  %158 = vmatmul.mubr.f32.gmra.mrb[0].mxu0 %v37
  %v159 = vpop.f32.mrb[0].mxu0
  %v160 = vadd.f32 0.0, %v159
  %v161 = vpop.f32.mrb[0].mxu0
  %162 = vmatprep.mubr.f32.mxu0 0.0
  %163 = vmatmul.mubr.f32.gmra.mrb[0].mxu0 %v38
  %v164 = vpop.f32.mrb[0].mxu0
  %v165 = vadd.f32 0.0, %v164
  %v166 = vpop.f32.mrb[0].mxu0
  %167 = vmatprep.mubr.f32.mxu0 0.0
  %168 = vmatmul.mubr.f32.gmra.mrb[0].mxu0 %v39
  %v169 = vpop.f32.mrb[0].mxu0
  %v170 = vadd.f32 0.0, %v169
  %v171 = vpop.f32.mrb[0].mxu0
  %172 = vmatprep.mubr.f32.mxu0 0.0
  %173 = vmatmul.mubr.f32.gmra.mrb[0].mxu0 %v40
  %v174 = vpop.f32.mrb[0].mxu0
  %v175 = vadd.f32 0.0, %v174
  %v176 = vpop.f32.mrb[0].mxu0
  %177 = vmatprep.mubr.f32.mxu0 0.0
  %178 = vmatmul.mubr.f32.gmra.mrb[0].mxu0 %v41
  %v179 = vpop.f32.mrb[0].mxu0
  %v180 = vadd.f32 0.0, %v179
  %v181 = vpop.f32.mrb[0].mxu0
  %182 = vmatprep.mubr.f32.mxu0 0.0
  %183 = vmatmul.mubr.f32.gmra.mrb[0].mxu0 %v42
  %v184 = vpop.f32.mrb[0].mxu0
  %v185 = vadd.f32 0.0, %v184
  %v186 = vpop.f32.mrb[0].mxu0
  %187 = vdwg.mxu0
  %188 = vmatprep.subr.mxu0 0.0
  %189 = vmatpush1.msra.mxu0 %v110
  %190 = vmatprep.subr.mxu0 0.0
  %191 = vmatpush1.msra.mxu0 %v115
  %192 = vmatprep.subr.mxu0 0.0
  %193 = vmatpush1.msra.mxu0 %v120
  %194 = vmatprep.subr.mxu0 0.0
  %195 = vmatpush1.msra.mxu0 %v125
  %196 = vmatprep.subr.mxu0 0.0
  %197 = vmatpush1.msra.mxu0 %v130
  %198 = vmatprep.subr.mxu0 0.0
  %199 = vmatpush1.msra.mxu0 %v135
  %200 = vmatprep.subr.mxu0 0.0
  %201 = vmatpush1.msra.mxu0 %v140
  %202 = vmatprep.subr.mxu0 0.0
  %203 = vmatpush1.msra.mxu0 %v145
  %204 = vmatprep.subr.mxu0 0.0
  %205 = vmatpush1.msra.mxu0 %v150
  %206 = vmatprep.subr.mxu0 0.0
  %207 = vmatpush1.msra.mxu0 %v155
  %208 = vmatprep.subr.mxu0 0.0
  %209 = vmatpush1.msra.mxu0 %v160
  %210 = vmatprep.subr.mxu0 0.0
  %211 = vmatpush1.msra.mxu0 %v165
  %212 = vmatprep.subr.mxu0 0.0
  %213 = vmatpush1.msra.mxu0 %v170
  %214 = vmatprep.subr.mxu0 0.0
  %215 = vmatpush1.msra.mxu0 %v175
  %216 = vmatprep.subr.mxu0 0.0
  %217 = vmatpush1.msra.mxu0 %v180
  %218 = vmatprep.subr.mxu0 0.0
  %219 = vmatpush1.msra.mxu0 %v185
  %220 = vmatprep.subr.mxu0 0.0
  %221 = vmatpush1.msra.mxu0 0.0
  %222 = vmatprep.subr.mxu0 0.0
  %223 = vmatpush1.msra.mxu0 0.0
  %224 = vmatprep.subr.mxu0 0.0
  %225 = vmatpush1.msra.mxu0 0.0
  %226 = vmatprep.subr.mxu0 0.0
  %227 = vmatpush1.msra.mxu0 0.0
  %228 = vmatprep.subr.mxu0 0.0
  %229 = vmatpush1.msra.mxu0 0.0
  %230 = vmatprep.subr.mxu0 0.0
  %231 = vmatpush1.msra.mxu0 0.0
  %232 = vmatprep.subr.mxu0 0.0
  %233 = vmatpush1.msra.mxu0 0.0
  %234 = vmatprep.subr.mxu0 0.0
  %235 = vmatpush1.msra.mxu0 0.0
  %236 = vmatprep.subr.mxu0 0.0
  %237 = vmatpush1.msra.mxu0 0.0
  %238 = vmatprep.subr.mxu0 0.0
  %239 = vmatpush1.msra.mxu0 0.0
  %240 = vmatprep.subr.mxu0 0.0
  %241 = vmatpush1.msra.mxu0 0.0
  %242 = vmatprep.subr.mxu0 0.0
  %243 = vmatpush1.msra.mxu0 0.0
  %244 = vmatprep.subr.mxu0 0.0
  %245 = vmatpush1.msra.mxu0 0.0
  %246 = vmatprep.subr.mxu0 0.0
  %247 = vmatpush1.msra.mxu0 0.0
  %248 = vmatprep.subr.mxu0 0.0
  %249 = vmatpush1.msra.mxu0 0.0
  %250 = vmatprep.subr.mxu0 0.0
  %251 = vmatpush1.msra.mxu0 0.0
  %252 = vmatprep.mubr.f32.mxu0 0.0
  %253 = vmatmul.mubr.f32.gmra.mrb[0].mxu0 %v27
  %v254 = vpop.f32.mrb[0].mxu0
  %v255 = vadd.f32 0.0, %v254
  %v256 = vpop.f32.mrb[0].mxu0
  %257 = vmatprep.mubr.f32.mxu0 0.0
  %258 = vmatmul.mubr.f32.gmra.mrb[0].mxu0 %v28
  %v259 = vpop.f32.mrb[0].mxu0
  %v260 = vadd.f32 0.0, %v259
  %v261 = vpop.f32.mrb[0].mxu0
  %262 = vmatprep.mubr.f32.mxu0 0.0
  %263 = vmatmul.mubr.f32.gmra.mrb[0].mxu0 %v29
  %v264 = vpop.f32.mrb[0].mxu0
  %v265 = vadd.f32 0.0, %v264
  %v266 = vpop.f32.mrb[0].mxu0
  %267 = vmatprep.mubr.f32.mxu0 0.0
  %268 = vmatmul.mubr.f32.gmra.mrb[0].mxu0 %v30
  %v269 = vpop.f32.mrb[0].mxu0
  %v270 = vadd.f32 0.0, %v269
  %v271 = vpop.f32.mrb[0].mxu0
  %272 = vmatprep.mubr.f32.mxu0 0.0
  %273 = vmatmul.mubr.f32.gmra.mrb[0].mxu0 %v31
  %v274 = vpop.f32.mrb[0].mxu0
  %v275 = vadd.f32 0.0, %v274
  %v276 = vpop.f32.mrb[0].mxu0
  %277 = vmatprep.mubr.f32.mxu0 0.0
  %278 = vmatmul.mubr.f32.gmra.mrb[0].mxu0 %v32
  %v279 = vpop.f32.mrb[0].mxu0
  %v280 = vadd.f32 0.0, %v279
  %v281 = vpop.f32.mrb[0].mxu0
  %282 = vmatprep.mubr.f32.mxu0 0.0
  %283 = vmatmul.mubr.f32.gmra.mrb[0].mxu0 %v33
  %v284 = vpop.f32.mrb[0].mxu0
  %v285 = vadd.f32 0.0, %v284
  %v286 = vpop.f32.mrb[0].mxu0
  %287 = vmatprep.mubr.f32.mxu0 0.0
  %288 = vmatmul.mubr.f32.gmra.mrb[0].mxu0 %v34
  %v289 = vpop.f32.mrb[0].mxu0
  %v290 = vadd.f32 0.0, %v289
  %v291 = vpop.f32.mrb[0].mxu0
  %292 = vmatprep.mubr.f32.mxu0 0.0
  %293 = vmatmul.mubr.f32.gmra.mrb[0].mxu0 %v35
  %v294 = vpop.f32.mrb[0].mxu0
  %v295 = vadd.f32 0.0, %v294
  %v296 = vpop.f32.mrb[0].mxu0
  %297 = vmatprep.mubr.f32.mxu0 0.0
  %298 = vmatmul.mubr.f32.gmra.mrb[0].mxu0 %v36
  %v299 = vpop.f32.mrb[0].mxu0
  %v300 = vadd.f32 0.0, %v299
  %v301 = vpop.f32.mrb[0].mxu0
  %302 = vmatprep.mubr.f32.mxu0 0.0
  %303 = vmatmul.mubr.f32.gmra.mrb[0].mxu0 %v37
  %v304 = vpop.f32.mrb[0].mxu0
  %v305 = vadd.f32 0.0, %v304
  %v306 = vpop.f32.mrb[0].mxu0
  %307 = vmatprep.mubr.f32.mxu0 0.0
  %308 = vmatmul.mubr.f32.gmra.mrb[0].mxu0 %v38
  %v309 = vpop.f32.mrb[0].mxu0
  %v310 = vadd.f32 0.0, %v309
  %v311 = vpop.f32.mrb[0].mxu0
  %312 = vmatprep.mubr.f32.mxu0 0.0
  %313 = vmatmul.mubr.f32.gmra.mrb[0].mxu0 %v39
  %v314 = vpop.f32.mrb[0].mxu0
  %v315 = vadd.f32 0.0, %v314
  %v316 = vpop.f32.mrb[0].mxu0
  %317 = vmatprep.mubr.f32.mxu0 0.0
  %318 = vmatmul.mubr.f32.gmra.mrb[0].mxu0 %v40
  %v319 = vpop.f32.mrb[0].mxu0
  %v320 = vadd.f32 0.0, %v319
  %v321 = vpop.f32.mrb[0].mxu0
  %322 = vmatprep.mubr.f32.mxu0 0.0
  %323 = vmatmul.mubr.f32.gmra.mrb[0].mxu0 %v41
  %v324 = vpop.f32.mrb[0].mxu0
  %v325 = vadd.f32 0.0, %v324
  %v326 = vpop.f32.mrb[0].mxu0
  %327 = vmatprep.mubr.f32.mxu0 0.0
  %328 = vmatmul.mubr.f32.gmra.mrb[0].mxu0 %v42
  %v329 = vpop.f32.mrb[0].mxu0
  %v330 = vadd.f32 0.0, %v329
  %v331 = vpop.f32.mrb[0].mxu0
  %332 = vdwg.mxu0
  %v333 = vadd.f32 %v110, %v255
  %v334 = vadd.f32 %v115, %v260
  %v335 = vadd.f32 %v120, %v265
  %v336 = vadd.f32 %v125, %v270
  %v337 = vadd.f32 %v130, %v275
  %v338 = vadd.f32 %v135, %v280
  %v339 = vadd.f32 %v140, %v285
  %v340 = vadd.f32 %v145, %v290
  %v341 = vadd.f32 %v150, %v295
  %v342 = vadd.f32 %v155, %v300
  %v343 = vadd.f32 %v160, %v305
  %v344 = vadd.f32 %v165, %v310
  %v345 = vadd.f32 %v170, %v315
  %v346 = vadd.f32 %v175, %v320
  %v347 = vadd.f32 %v180, %v325
  %v348 = vadd.f32 %v185, %v330
  %349 = vmatprep.subr.mxu0 0.0
  %350 = vmatpush1.msra.mxu0 %v255
  %351 = vmatprep.subr.mxu0 0.0
  %352 = vmatpush1.msra.mxu0 %v260
  %353 = vmatprep.subr.mxu0 0.0
  %354 = vmatpush1.msra.mxu0 %v265
  %355 = vmatprep.subr.mxu0 0.0
  %356 = vmatpush1.msra.mxu0 %v270
  %357 = vmatprep.subr.mxu0 0.0
  %358 = vmatpush1.msra.mxu0 %v275
  %359 = vmatprep.subr.mxu0 0.0
  %360 = vmatpush1.msra.mxu0 %v280
  %361 = vmatprep.subr.mxu0 0.0
  %362 = vmatpush1.msra.mxu0 %v285
  %363 = vmatprep.subr.mxu0 0.0
  %364 = vmatpush1.msra.mxu0 %v290
  %365 = vmatprep.subr.mxu0 0.0
  %366 = vmatpush1.msra.mxu0 %v295
  %367 = vmatprep.subr.mxu0 0.0
  %368 = vmatpush1.msra.mxu0 %v300
  %369 = vmatprep.subr.mxu0 0.0
  %370 = vmatpush1.msra.mxu0 %v305
  %371 = vmatprep.subr.mxu0 0.0
  %372 = vmatpush1.msra.mxu0 %v310
  %373 = vmatprep.subr.mxu0 0.0
  %374 = vmatpush1.msra.mxu0 %v315
  %375 = vmatprep.subr.mxu0 0.0
  %376 = vmatpush1.msra.mxu0 %v320
  %377 = vmatprep.subr.mxu0 0.0
  %378 = vmatpush1.msra.mxu0 %v325
  %379 = vmatprep.subr.mxu0 0.0
  %380 = vmatpush1.msra.mxu0 %v330
  %381 = vmatprep.subr.mxu0 0.0
  %382 = vmatpush1.msra.mxu0 0.0
  %383 = vmatprep.subr.mxu0 0.0
  %384 = vmatpush1.msra.mxu0 0.0
  %385 = vmatprep.subr.mxu0 0.0
  %386 = vmatpush1.msra.mxu0 0.0
  %387 = vmatprep.subr.mxu0 0.0
  %388 = vmatpush1.msra.mxu0 0.0
  %389 = vmatprep.subr.mxu0 0.0
  %390 = vmatpush1.msra.mxu0 0.0
  %391 = vmatprep.subr.mxu0 0.0
  %392 = vmatpush1.msra.mxu0 0.0
  %393 = vmatprep.subr.mxu0 0.0
  %394 = vmatpush1.msra.mxu0 0.0
  %395 = vmatprep.subr.mxu0 0.0
  %396 = vmatpush1.msra.mxu0 0.0
  %397 = vmatprep.subr.mxu0 0.0
  %398 = vmatpush1.msra.mxu0 0.0
  %399 = vmatprep.subr.mxu0 0.0
  %400 = vmatpush1.msra.mxu0 0.0
  %401 = vmatprep.subr.mxu0 0.0
  %402 = vmatpush1.msra.mxu0 0.0
  %403 = vmatprep.subr.mxu0 0.0
  %404 = vmatpush1.msra.mxu0 0.0
  %405 = vmatprep.subr.mxu0 0.0
  %406 = vmatpush1.msra.mxu0 0.0
  %407 = vmatprep.subr.mxu0 0.0
  %408 = vmatpush1.msra.mxu0 0.0
  %409 = vmatprep.subr.mxu0 0.0
  %410 = vmatpush1.msra.mxu0 0.0
  %411 = vmatprep.subr.mxu0 0.0
  %412 = vmatpush1.msra.mxu0 0.0
  %413 = vmatprep.mubr.f32.mxu0 0.0
  %414 = vmatmul.mubr.f32.gmra.mrb[0].mxu0 %v27
  %v415 = vpop.f32.mrb[0].mxu0
  %v416 = vadd.f32 0.0, %v415
  %v417 = vpop.f32.mrb[0].mxu0
  %418 = vmatprep.mubr.f32.mxu0 0.0
  %419 = vmatmul.mubr.f32.gmra.mrb[0].mxu0 %v28
  %v420 = vpop.f32.mrb[0].mxu0
  %v421 = vadd.f32 0.0, %v420
  %v422 = vpop.f32.mrb[0].mxu0
  %423 = vmatprep.mubr.f32.mxu0 0.0
  %424 = vmatmul.mubr.f32.gmra.mrb[0].mxu0 %v29
  %v425 = vpop.f32.mrb[0].mxu0
  %v426 = vadd.f32 0.0, %v425
  %v427 = vpop.f32.mrb[0].mxu0
  %428 = vmatprep.mubr.f32.mxu0 0.0
  %429 = vmatmul.mubr.f32.gmra.mrb[0].mxu0 %v30
  %v430 = vpop.f32.mrb[0].mxu0
  %v431 = vadd.f32 0.0, %v430
  %v432 = vpop.f32.mrb[0].mxu0
  %433 = vmatprep.mubr.f32.mxu0 0.0
  %434 = vmatmul.mubr.f32.gmra.mrb[0].mxu0 %v31
  %v435 = vpop.f32.mrb[0].mxu0
  %v436 = vadd.f32 0.0, %v435
  %v437 = vpop.f32.mrb[0].mxu0
  %438 = vmatprep.mubr.f32.mxu0 0.0
  %439 = vmatmul.mubr.f32.gmra.mrb[0].mxu0 %v32
  %v440 = vpop.f32.mrb[0].mxu0
  %v441 = vadd.f32 0.0, %v440
  %v442 = vpop.f32.mrb[0].mxu0
  %443 = vmatprep.mubr.f32.mxu0 0.0
  %444 = vmatmul.mubr.f32.gmra.mrb[0].mxu0 %v33
  %v445 = vpop.f32.mrb[0].mxu0
  %v446 = vadd.f32 0.0, %v445
  %v447 = vpop.f32.mrb[0].mxu0
  %448 = vmatprep.mubr.f32.mxu0 0.0
  %449 = vmatmul.mubr.f32.gmra.mrb[0].mxu0 %v34
  %v450 = vpop.f32.mrb[0].mxu0
  %v451 = vadd.f32 0.0, %v450
  %v452 = vpop.f32.mrb[0].mxu0
  %453 = vmatprep.mubr.f32.mxu0 0.0
  %454 = vmatmul.mubr.f32.gmra.mrb[0].mxu0 %v35
  %v455 = vpop.f32.mrb[0].mxu0
  %v456 = vadd.f32 0.0, %v455
  %v457 = vpop.f32.mrb[0].mxu0
  %458 = vmatprep.mubr.f32.mxu0 0.0
  %459 = vmatmul.mubr.f32.gmra.mrb[0].mxu0 %v36
  %v460 = vpop.f32.mrb[0].mxu0
  %v461 = vadd.f32 0.0, %v460
  %v462 = vpop.f32.mrb[0].mxu0
  %463 = vmatprep.mubr.f32.mxu0 0.0
  %464 = vmatmul.mubr.f32.gmra.mrb[0].mxu0 %v37
  %v465 = vpop.f32.mrb[0].mxu0
  %v466 = vadd.f32 0.0, %v465
  %v467 = vpop.f32.mrb[0].mxu0
  %468 = vmatprep.mubr.f32.mxu0 0.0
  %469 = vmatmul.mubr.f32.gmra.mrb[0].mxu0 %v38
  %v470 = vpop.f32.mrb[0].mxu0
  %v471 = vadd.f32 0.0, %v470
  %v472 = vpop.f32.mrb[0].mxu0
  %473 = vmatprep.mubr.f32.mxu0 0.0
  %474 = vmatmul.mubr.f32.gmra.mrb[0].mxu0 %v39
  %v475 = vpop.f32.mrb[0].mxu0
  %v476 = vadd.f32 0.0, %v475
  %v477 = vpop.f32.mrb[0].mxu0
  %478 = vmatprep.mubr.f32.mxu0 0.0
  %479 = vmatmul.mubr.f32.gmra.mrb[0].mxu0 %v40
  %v480 = vpop.f32.mrb[0].mxu0
  %v481 = vadd.f32 0.0, %v480
  %v482 = vpop.f32.mrb[0].mxu0
  %483 = vmatprep.mubr.f32.mxu0 0.0
  %484 = vmatmul.mubr.f32.gmra.mrb[0].mxu0 %v41
  %v485 = vpop.f32.mrb[0].mxu0
  %v486 = vadd.f32 0.0, %v485
  %v487 = vpop.f32.mrb[0].mxu0
  %488 = vmatprep.mubr.f32.mxu0 0.0
  %489 = vmatmul.mubr.f32.gmra.mrb[0].mxu0 %v42
  %v490 = vpop.f32.mrb[0].mxu0
  %v491 = vadd.f32 0.0, %v490
  %v492 = vpop.f32.mrb[0].mxu0
  %493 = vdwg.mxu0
  %v494 = vadd.f32 %v333, %v416
  %v495 = vadd.f32 %v334, %v421
  %v496 = vadd.f32 %v335, %v426
  %v497 = vadd.f32 %v336, %v431
  %v498 = vadd.f32 %v337, %v436
  %v499 = vadd.f32 %v338, %v441
  %v500 = vadd.f32 %v339, %v446
  %v501 = vadd.f32 %v340, %v451
  %v502 = vadd.f32 %v341, %v456
  %v503 = vadd.f32 %v342, %v461
  %v504 = vadd.f32 %v343, %v466
  %v505 = vadd.f32 %v344, %v471
  %v506 = vadd.f32 %v345, %v476
  %v507 = vadd.f32 %v346, %v481
  %v508 = vadd.f32 %v347, %v486
  %v509 = vadd.f32 %v348, %v491
  %v510 = vmul.f32 %v494, 0.33333334
  %v511 = vmul.f32 %v495, 0.33333334
  %v512 = vmul.f32 %v496, 0.33333334
  %v513 = vmul.f32 %v497, 0.33333334
  %v514 = vmul.f32 %v498, 0.33333334
  %v515 = vmul.f32 %v499, 0.33333334
  %v516 = vmul.f32 %v500, 0.33333334
  %v517 = vmul.f32 %v501, 0.33333334
  %v518 = vmul.f32 %v502, 0.33333334
  %v519 = vmul.f32 %v503, 0.33333334
  %v520 = vmul.f32 %v504, 0.33333334
  %v521 = vmul.f32 %v505, 0.33333334
  %v522 = vmul.f32 %v506, 0.33333334
  %v523 = vmul.f32 %v507, 0.33333334
  %v524 = vmul.f32 %v508, 0.33333334
  %v525 = vmul.f32 %v509, 0.33333334
  %526 = vst [vmem:[%s2] sm:$0xff] %v510
  %527 = vst [vmem:[%s2 + $0x8] sm:$0xff] %v511
  %528 = vst [vmem:[%s2 + $0x10] sm:$0xff] %v512
  %529 = vst [vmem:[%s2 + $0x18] sm:$0xff] %v513
  %530 = vst [vmem:[%s2 + $0x20] sm:$0xff] %v514
  %531 = vst [vmem:[%s2 + $0x28] sm:$0xff] %v515
  %532 = vst [vmem:[%s2 + $0x30] sm:$0xff] %v516
  %533 = vst [vmem:[%s2 + $0x38] sm:$0xff] %v517
  %534 = vst [vmem:[%s2 + $0x40] sm:$0xff] %v518
  %535 = vst [vmem:[%s2 + $0x48] sm:$0xff] %v519
  %536 = vst [vmem:[%s2 + $0x50] sm:$0xff] %v520
  %537 = vst [vmem:[%s2 + $0x58] sm:$0xff] %v521
  %538 = vst [vmem:[%s2 + $0x60] sm:$0xff] %v522
  %539 = vst [vmem:[%s2 + $0x68] sm:$0xff] %v523
  %540 = vst [vmem:[%s2 + $0x70] sm:$0xff] %v524
  %541 = vst [vmem:[%s2 + $0x78] sm:$0xff] %v525
  // Predicated region
  $region10: #{lightgcn_forward.1} parent=0 // pred_check
    _
  $region11: #{lightgcn_forward.1} parent=0 // pred_check_branch
    %543 = sbr.rel (0) target = $region13
  $region12: #{lightgcn_forward.1} parent=0 // pred_region
    _
  $region13: #{lightgcn_forward.1} parent=0 // pred_fallthru
    _
  // Predicated region
  $region14: #{lightgcn_forward.1} parent=0 // pred_check
    _
  $region15: #{lightgcn_forward.1} parent=0 // pred_check_branch
    %545 = sbr.rel (0) target = $region17
  $region16: #{lightgcn_forward.1} parent=0 // pred_region
    _
  $region17: #{lightgcn_forward.1} parent=0 // pred_fallthru
    _

</llo_original>
